<compile_context>
chip_gen: v7x
topology: tpu7x:2x2x1
jax: 0.10.0
libtpu: 0.0.40
codegen_flags: <defaults>
</compile_context>

<pallas_src>
import jax
import jax.numpy as jnp
from jax.experimental import pallas as pl
from jax.experimental.pallas import tpu as pltpu

EMBDIM = 32         # self.embdim
VOCAB = 231         # nn.Embedding(231, 32)
VOCAB_PAD = 256     # vocab padded to a lane-friendly K for the one-hot matmul
BERT_HIDDEN = 768   # RoBERTa hidden size


def _round_up(x, m):
    return (x + m - 1) // m * m


def nbl_head_kernel(tids_ref, cls_ref, w_cls_ref, emb_tab_ref, out_ref):
    """Fused CLS-classifier + embedding-logit gather for one (batch, class) tile.

    tids_ref    : [TB, 1]             int32  token-type ids
    cls_ref     : [TB, 768]           bf16   dropout(sequence_output[:, 0, :])
    w_cls_ref   : [768, TC]           bf16   classifier weight rows 0:768 (padded cols)
    emb_tab_ref : [VOCAB_PAD, TC]     bf16   emb_table @ W[:, 768:800] + bias (padded)
    out_ref     : [TB, TC]            f32    logits (padded cols)
    """
    tb = cls_ref.shape[0]

    # Main matmul: bf16 x bf16 on the MXU with f32 accumulation.
    acc = jnp.dot(cls_ref[...], w_cls_ref[...], preferred_element_type=jnp.float32)

    # Embedding (+ bias) contribution: one-hot gather of the precomputed
    # per-tid logit rows.  tids < VOCAB, padded table rows are zero, the 1.0 of
    # the one-hot is exact in bf16, so this is a bf16-MXU pass with no extra
    # rounding beyond the table itself.
    vocab_iota = jax.lax.broadcasted_iota(jnp.int32, (tb, VOCAB_PAD), 1)
    onehot = (vocab_iota == tids_ref[...]).astype(jnp.bfloat16)          # [TB, VOCAB_PAD]
    acc = acc + jnp.dot(onehot, emb_tab_ref[...], preferred_element_type=jnp.float32)

    out_ref[...] = acc


def init_params(key, classes, initializer_range=0.02):
    """Deterministic init mirroring _init_cls_weight (PyTorch parameter layout)."""
    k_emb, k_cls = jax.random.split(key)
    emb_table = initializer_range * jax.random.normal(
        k_emb, (VOCAB, EMBDIM), dtype=jnp.float32)
    w_full = initializer_range * jax.random.normal(                      # [classes, 800]
        k_cls, (classes, BERT_HIDDEN + EMBDIM), dtype=jnp.float32)
    return {
        "emb": emb_table,                                                # [231, 32]
        "w_full": w_full,                                                # [classes, 800]
        "b": jnp.zeros((classes,), dtype=jnp.float32),                   # [classes]
    }


def _prepare_head_params(params):
    """Pad/split the PyTorch-layout parameters into kernel-ready tensors."""
    classes = params["b"].shape[0]
    c_pad = _round_up(classes, 128)

    w_t = params["w_full"].T                                             # [800, classes]
    w_cls = jnp.zeros((BERT_HIDDEN, c_pad), jnp.float32)
    w_cls = w_cls.at[:, :classes].set(w_t[:BERT_HIDDEN]).astype(jnp.bfloat16)

    # Fold emb-lookup @ W_emb and the classifier bias into one bf16 table.
    w_emb = w_t[BERT_HIDDEN:]                                            # [32, classes] f32
    tab_core = (jnp.dot(params["emb"], w_emb,
                        precision=jax.lax.Precision.HIGHEST)             # [231, classes]
                + params["b"][None, :])
    emb_tab = jnp.zeros((VOCAB_PAD, c_pad), jnp.float32)
    emb_tab = emb_tab.at[:VOCAB, :classes].set(tab_core).astype(jnp.bfloat16)
    return w_cls, emb_tab, c_pad


def nbl_forward(sequence_output, tids, params, y=None, tile_b=1024, tile_c=1024):
    """NBLModel.forward given the bert sequence output (eval mode)."""
    B, S, H = sequence_output.shape
    assert H == BERT_HIDDEN
    classes = params["b"].shape[0]

    w_cls, emb_tab, c_pad = _prepare_head_params(params)

    # Batch tile: big enough to amortize per-step overhead, but never letting
    # the grid collapse to a single step when B is large (keeps both v7x
    # TensorCores busy via the "parallel" batch axis).
    if B > 16:
        tb = min(tile_b, _round_up(pl.cdiv(B, 2), 8))
    else:
        tb = min(tile_b, B)
    tc = min(tile_c, c_pad)                        # class tile (single step usually)
    grid = (pl.cdiv(B, tb), pl.cdiv(c_pad, tc))    # class axis innermost

    # Copy-free reshape; the BlockSpec then DMAs only the CLS columns 0:768.
    # Explicit bf16 cast so an f32 backbone output doesn't double the DMA.
    seq2d = sequence_output.reshape(B, S * H).astype(jnp.bfloat16)
    tids2d = tids.reshape(B, 1).astype(jnp.int32)
    # NOTE: tids >= VOCAB would select a zero padded table row (silent), unlike
    # PyTorch's nn.Embedding which raises.  Callers must keep tids < 231.

    cost = pl.CostEstimate(
        flops=2 * B * (H + VOCAB_PAD) * c_pad,
        transcendentals=0,
        bytes_accessed=(B * H * 2                       # bf16 CLS rows
                        + B * 4                         # tids
                        + (H + VOCAB_PAD) * c_pad * 2   # bf16 weight + table
                        + B * c_pad * 4))               # f32 logits out

    # Double-buffered VMEM footprint (lane/sublane padded) -> scoped limit.
    def _block_bytes(r, c, itemsize):
        return _round_up(r, 8) * _round_up(c, 128) * itemsize
    per_buf = (_block_bytes(tb, H, 2) + _block_bytes(tb, 1, 4)
               + _block_bytes(H, tc, 2) + _block_bytes(VOCAB_PAD, tc, 2)
               + _block_bytes(tb, tc, 4))
    vmem_limit = int(max(32 * 1024 * 1024,
                         min(2 * per_buf + (2 << 20), 64 * 1024 * 1024)))

    logits_pad = pl.pallas_call(
        nbl_head_kernel,
        out_shape=jax.ShapeDtypeStruct((B, c_pad), jnp.float32),
        grid_spec=pltpu.PrefetchScalarGridSpec(
            num_scalar_prefetch=0,
            grid=grid,
            in_specs=[
                pl.BlockSpec((tb, 1), lambda i, j: (i, 0)),            # tids
                pl.BlockSpec((tb, H), lambda i, j: (i, 0)),            # CLS rows of seq2d
                pl.BlockSpec((H, tc), lambda i, j: (0, j)),            # w_cls
                pl.BlockSpec((VOCAB_PAD, tc), lambda i, j: (0, j)),    # emb-logit table
            ],
            out_specs=pl.BlockSpec((tb, tc), lambda i, j: (i, j)),
        ),
        compiler_params=pltpu.CompilerParams(
            dimension_semantics=("parallel", "parallel"),
            vmem_limit_bytes=vmem_limit,
        ),
        cost_estimate=cost,
    )(tids2d, seq2d, w_cls, emb_tab)

    logits = logits_pad[:, :classes]
    if y is not None:
        # nn.CrossEntropyLoss() with mean reduction (kept in XLA; tiny).
        logp = jax.nn.log_softmax(logits, axis=-1)
        return -jnp.mean(jnp.take_along_axis(logp, y[:, None], axis=1))
    return logits


def nbl_forward_ref(sequence_output, tids, params, y=None):
    """Pure-JAX reference mirroring the PyTorch forward, with the same bf16
    rounding applied to the CLS activations, the 768-wide weight block and the
    fused (emb @ W_emb + bias) table so the 1e-4 check stays tight."""
    cls = sequence_output[:, 0, :].astype(jnp.bfloat16).astype(jnp.float32)
    w = params["w_full"]
    w_cls = w[:, :BERT_HIDDEN].astype(jnp.bfloat16).astype(jnp.float32)   # [C, 768]
    w_emb = w[:, BERT_HIDDEN:]                                            # [C, 32]
    tab = (jnp.dot(params["emb"], w_emb.T, precision=jax.lax.Precision.HIGHEST)
           + params["b"][None, :])                                        # [231, C]
    tab = tab.astype(jnp.bfloat16).astype(jnp.float32)
    logits = (jnp.dot(cls, w_cls.T, precision=jax.lax.Precision.HIGHEST)
              + tab[tids])
    if y is not None:
        logp = jax.nn.log_softmax(logits, axis=-1)
        return -jnp.mean(jnp.take_along_axis(logp, y[:, None], axis=1))
    return logits


if __name__ == "__main__":
    key = jax.random.PRNGKey(0)
    k_params, k_seq, k_tid, k_y = jax.random.split(key, 4)

    B, S, CLASSES = 2, 8, 10
    params = init_params(k_params, CLASSES)

    # Stand-in for the RoBERTa sequence output (see TODO at top); bf16 as a real
    # backbone would emit.
    sequence_output = jax.random.normal(
        k_seq, (B, S, BERT_HIDDEN), dtype=jnp.float32).astype(jnp.bfloat16)
    tids = jax.random.randint(k_tid, (B,), 0, VOCAB, dtype=jnp.int32)
    y = jax.random.randint(k_y, (B,), 0, CLASSES, dtype=jnp.int32)

    # Logits path
    logits = jax.block_until_ready(nbl_forward(sequence_output, tids, params))
    logits_ref = nbl_forward_ref(sequence_output, tids, params)
    assert logits.shape == (B, CLASSES)
    assert jnp.allclose(logits, logits_ref, atol=1e-4, rtol=1e-4)

    # Loss path (y provided)
    loss = jax.block_until_ready(nbl_forward(sequence_output, tids, params, y=y))
    loss_ref = nbl_forward_ref(sequence_output, tids, params, y=y)
    assert jnp.allclose(loss, loss_ref, atol=1e-4, rtol=1e-4)

    print("KERNEL_OK")
</pallas_src>

<mosaic_0001>
module attributes {stable_mosaic.version = 11 : i64} {
  func.func @nbl_head_kernel(%arg0: i32, %arg1: i32, %arg2: memref<2x1xi32, #tpu.memory_space<vmem>>, %arg3: memref<2x768xbf16, #tpu.memory_space<vmem>>, %arg4: memref<768x128xbf16, #tpu.memory_space<vmem>>, %arg5: memref<256x128xbf16, #tpu.memory_space<vmem>>, %arg6: memref<2x128xf32, #tpu.memory_space<vmem>>) attributes {dimension_semantics = [#tpu.dimension_semantics<parallel>, #tpu.dimension_semantics<parallel>], iteration_bounds = array<i64: 1, 1>, scalar_prefetch = 0 : i64, scratch_operands = 0 : i64, tpu.core_type = #tpu.core_type<tc>, window_params = [{transform_indices = @transform_0, window_bounds = array<i64: 2, 1>}, {transform_indices = @transform_1, window_bounds = array<i64: 2, 768>}, {transform_indices = @transform_2, window_bounds = array<i64: 768, 128>}, {transform_indices = @transform_3, window_bounds = array<i64: 256, 128>}, {transform_indices = @transform_4, window_bounds = array<i64: 2, 128>}]} {
    %c0 = arith.constant 0 : index
    %c0_0 = arith.constant 0 : index
    %0 = vector.load %arg3[%c0, %c0_0] : memref<2x768xbf16, #tpu.memory_space<vmem>>, vector<2x768xbf16>
    %c0_1 = arith.constant 0 : index
    %c0_2 = arith.constant 0 : index
    %1 = vector.load %arg4[%c0_1, %c0_2] : memref<768x128xbf16, #tpu.memory_space<vmem>>, vector<768x128xbf16>
    %cst = arith.constant dense<0.000000e+00> : vector<2x128xf32>
    %2 = tpu.matmul %0, %1, %cst {dimension_numbers = #tpu.dot_dimension_numbers<[1], [0], [0], [1], [0, 0, 1, 1], [], []>} : vector<2x768xbf16>, vector<768x128xbf16>, vector<2x128xf32> -> vector<2x128xf32>
    %3 = tpu.iota {dimensions = array<i32: 1>} : vector<2x256xi32>
    %c0_3 = arith.constant 0 : index
    %c0_4 = arith.constant 0 : index
    %4 = vector.load %arg2[%c0_3, %c0_4] : memref<2x1xi32, #tpu.memory_space<vmem>>, vector<2x1xi32>
    %5 = vector.broadcast %4 : vector<2x1xi32> to vector<2x256xi32>
    %6 = arith.cmpi eq, %3, %5 : vector<2x256xi32>
    %7 = arith.extui %6 : vector<2x256xi1> to vector<2x256xi32>
    %8 = arith.sitofp %7 : vector<2x256xi32> to vector<2x256xf32>
    %9 = arith.truncf %8 : vector<2x256xf32> to vector<2x256xbf16>
    %c0_5 = arith.constant 0 : index
    %c0_6 = arith.constant 0 : index
    %10 = vector.load %arg5[%c0_5, %c0_6] : memref<256x128xbf16, #tpu.memory_space<vmem>>, vector<256x128xbf16>
    %cst_7 = arith.constant dense<0.000000e+00> : vector<2x128xf32>
    %11 = tpu.matmul %9, %10, %cst_7 {dimension_numbers = #tpu.dot_dimension_numbers<[1], [0], [0], [1], [0, 0, 1, 1], [], []>} : vector<2x256xbf16>, vector<256x128xbf16>, vector<2x128xf32> -> vector<2x128xf32>
    %12 = arith.addf %2, %11 : vector<2x128xf32>
    %c0_8 = arith.constant 0 : index
    %c0_9 = arith.constant 0 : index
    %13 = vector.load %arg6[%c0_8, %c0_9] : memref<2x128xf32, #tpu.memory_space<vmem>>, vector<2x128xf32>
    tpu.vector_store %arg6[%c0_8, %c0_9], %12 {strides = array<i32>} : memref<2x128xf32, #tpu.memory_space<vmem>>, vector<2x128xf32>,
    return
  }
  func.func @transform_0(%arg0: i32, %arg1: i32) -> (i32, i32) {
    %c0_i32 = arith.constant 0 : i32
    %c0_i32_0 = arith.constant 0 : i32
    return %arg0, %c0_i32 : i32, i32
  }
  func.func @transform_1(%arg0: i32, %arg1: i32) -> (i32, i32) {
    %c0_i32 = arith.constant 0 : i32
    %c0_i32_0 = arith.constant 0 : i32
    return %arg0, %c0_i32 : i32, i32
  }
  func.func @transform_2(%arg0: i32, %arg1: i32) -> (i32, i32) {
    %c0_i32 = arith.constant 0 : i32
    %c0_i32_0 = arith.constant 0 : i32
    return %c0_i32, %arg1 : i32, i32
  }
  func.func @transform_3(%arg0: i32, %arg1: i32) -> (i32, i32) {
    %c0_i32 = arith.constant 0 : i32
    %c0_i32_0 = arith.constant 0 : i32
    return %c0_i32, %arg1 : i32, i32
  }
  func.func @transform_4(%arg0: i32, %arg1: i32) -> (i32, i32) {
    %c0_i32 = arith.constant 0 : i32
    return %arg0, %arg1 : i32, i32
  }
}

</mosaic_0001>

<llo_original>
// kernel: tpu_custom_call.1
$region0: #{tpu_custom_call.1}
  #allocation0 [shape = 'u32[]', space=smem, size = 0x4, offset = 0x4, fixed_abs, tag = 'smem constant byte address 0x4 - core index']
  #allocation1 [shape = 'u32[144,128]{1,0:T(1,128)}', space=vmem, size = 0x12000, scoped, tag = 'internal scratch']
  %s0 = inlined_call_operand.vmem [shape: s32[2,1], index: 0, kind: input, shape index: {}]
  %s1 = inlined_call_operand.hbm [shape: bf16[2,6144], index: 1, kind: input, shape index: {}]
  %s2 = inlined_call_operand.hbm [shape: bf16[768,128], index: 2, kind: input, shape index: {}]
  %s3 = inlined_call_operand.hbm [shape: bf16[256,128], index: 3, kind: input, shape index: {}]
  %s4 = inlined_call_operand.hbm [shape: f32[2,128], index: 4, kind: output, shape index: {}]
  %s5 = sld [smem:[#allocation0]]
  $region38: #{tpu_custom_call.1} parent=0
    _
  %s7 = ssub.s32 1, %s5
  %s8 = scalar_select 0, %s7, %s5
  $region1: #{tpu_custom_call.1} parent=0
    #allocation2 [shape = 'u8[3072]{0}', space=vmem, size = 0xc00, scoped, tag = 'input window, operand 1, single buffered']
    #allocation3 [shape = 's32[1]{0}', space=sflag, size = 0x4, scoped, tag = 'scoped memory for tpu_custom_call.1']
    #allocation4 [shape = 's32[1]{0}', space=sflag, size = 0x4, scoped, tag = 'scoped memory for tpu_custom_call.1']
    #allocation5 [shape = 'u8[196608]{0}', space=vmem, size = 0x30000, scoped, tag = 'input window, operand 2, single buffered']
    #allocation6 [shape = 's32[1]{0}', space=sflag, size = 0x4, scoped, tag = 'scoped memory for tpu_custom_call.1']
    #allocation7 [shape = 'u8[65536]{0}', space=vmem, size = 0x10000, scoped, tag = 'input window, operand 3, single buffered']
    #allocation8 [shape = 'u8[1024]{0}', space=vmem, size = 0x400, scoped, tag = 'output window, operand 0, single buffered']
    %9 = vsyncpa [#allocation3], 0
    %10 = vsyncpa [#allocation6], 0
    %11 = vsyncpa [#allocation4], 0
    // Predicated region
    $region2: #{tpu_custom_call.1} parent=1 // pred_check
      _
    $region3: #{tpu_custom_call.1} parent=1 // pred_check_branch
      %13 = sbr.rel (0) target = $region5
    $region4: #{tpu_custom_call.1} parent=1 // pred_region
      _
    $region5: #{tpu_custom_call.1} parent=1 // pred_fallthru
      _
    // Predicated region
    $region6: #{tpu_custom_call.1} parent=1 // pred_check
      _
    $region7: #{tpu_custom_call.1} parent=1 // pred_check_branch
      %15 = sbr.rel (0) target = $region9
    $region8: #{tpu_custom_call.1} parent=1 // pred_region
      %s17 = ssub.s32 96, 96
      %18 = vsyncadd [#allocation3], %s17
      %s20 = sshll.u32 [#allocation2], 4
      %s21 = int_to_ptr.vmem [resolvable:$true] %s20
      %23 = dma.hbm_to_vmem [thread:$0]  %s1, 96, %s21, [#allocation3]
    $region9: #{tpu_custom_call.1} parent=1 // pred_fallthru
      _
    // Predicated region
    $region10: #{tpu_custom_call.1} parent=1 // pred_check
      _
    $region11: #{tpu_custom_call.1} parent=1 // pred_check_branch
      %25 = sbr.rel (0) target = $region13
    $region12: #{tpu_custom_call.1} parent=1 // pred_region
      %s27 = ssub.s32 6144, 6144
      %28 = vsyncadd [#allocation6], %s27
      %s29 = sshll.u32 [#allocation5], 4
      %s30 = int_to_ptr.vmem [resolvable:$true] %s29
      %35 = dma.hbm_to_vmem [thread:$0]  %s2, 6144, %s30, [#allocation6], 64, 64, 4
    $region13: #{tpu_custom_call.1} parent=1 // pred_fallthru
      _
    // Predicated region
    $region14: #{tpu_custom_call.1} parent=1 // pred_check
      _
    $region15: #{tpu_custom_call.1} parent=1 // pred_check_branch
      %37 = sbr.rel (0) target = $region17
    $region16: #{tpu_custom_call.1} parent=1 // pred_region
      %s39 = ssub.s32 2048, 2048
      %40 = vsyncadd [#allocation6], %s39
      %s41 = sshll.u32 [#allocation7], 4
      %s42 = int_to_ptr.vmem [resolvable:$true] %s41
      %47 = dma.hbm_to_vmem [thread:$0]  %s3, 2048, %s42, [#allocation6], 64, 64, 4
    $region17: #{tpu_custom_call.1} parent=1 // pred_fallthru
      _
    // Predicated region
    $region18: #{tpu_custom_call.1} parent=1 // pred_check
      _
    $region19: #{tpu_custom_call.1} parent=1 // pred_check_branch
      %49 = sbr.rel (0) target = $region21
    $region20: #{tpu_custom_call.1} parent=1 // pred_region
      %50 = dma.done [#allocation3], 96
    $region21: #{tpu_custom_call.1} parent=1 // pred_fallthru
      _
    // Predicated region
    $region22: #{tpu_custom_call.1} parent=1 // pred_check
      _
    $region23: #{tpu_custom_call.1} parent=1 // pred_check_branch
      %52 = sbr.rel (0) target = $region25
    $region24: #{tpu_custom_call.1} parent=1 // pred_region
      %53 = dma.done [#allocation6], 6144
    $region25: #{tpu_custom_call.1} parent=1 // pred_fallthru
      _
    // Predicated region
    $region26: #{tpu_custom_call.1} parent=1 // pred_check
      _
    $region27: #{tpu_custom_call.1} parent=1 // pred_check_branch
      %55 = sbr.rel (0) target = $region29
    $region28: #{tpu_custom_call.1} parent=1 // pred_region
      %56 = dma.done [#allocation6], 2048
    $region29: #{tpu_custom_call.1} parent=1 // pred_fallthru
      _
    %v58 = vld [vmem:[#allocation2] sm:$0x3f]
    %v59 = vld [vmem:[#allocation5] sm:$0xf]
    %v60 = vld [vmem:[#allocation5 + $0x4] sm:$0xf]
    %v61 = vld [vmem:[#allocation5 + $0x8] sm:$0xf]
    %v62 = vld [vmem:[#allocation5 + $0xc] sm:$0xf]
    %v63 = vld [vmem:[#allocation5 + $0x10] sm:$0xf]
    %v64 = vld [vmem:[#allocation5 + $0x14] sm:$0xf]
    %v65 = vld [vmem:[#allocation5 + $0x18] sm:$0xf]
    %v66 = vld [vmem:[#allocation5 + $0x1c] sm:$0xf]
    %v67 = vld [vmem:[#allocation5 + $0x20] sm:$0xf]
    %v68 = vld [vmem:[#allocation5 + $0x24] sm:$0xf]
    %v69 = vld [vmem:[#allocation5 + $0x28] sm:$0xf]
    %v70 = vld [vmem:[#allocation5 + $0x2c] sm:$0xf]
    %v71 = vld [vmem:[#allocation5 + $0x30] sm:$0xf]
    %v72 = vld [vmem:[#allocation5 + $0x34] sm:$0xf]
    %v73 = vld [vmem:[#allocation5 + $0x38] sm:$0xf]
    %v74 = vld [vmem:[#allocation5 + $0x3c] sm:$0xf]
    %v75 = vld [vmem:[#allocation5 + $0x40] sm:$0xf]
    %v76 = vld [vmem:[#allocation5 + $0x44] sm:$0xf]
    %v77 = vld [vmem:[#allocation5 + $0x48] sm:$0xf]
    %v78 = vld [vmem:[#allocation5 + $0x4c] sm:$0xf]
    %v79 = vld [vmem:[#allocation5 + $0x50] sm:$0xf]
    %v80 = vld [vmem:[#allocation5 + $0x54] sm:$0xf]
    %v81 = vld [vmem:[#allocation5 + $0x58] sm:$0xf]
    %v82 = vld [vmem:[#allocation5 + $0x5c] sm:$0xf]
    %v83 = vld [vmem:[#allocation5 + $0x60] sm:$0xf]
    %v84 = vld [vmem:[#allocation5 + $0x64] sm:$0xf]
    %v85 = vld [vmem:[#allocation5 + $0x68] sm:$0xf]
    %v86 = vld [vmem:[#allocation5 + $0x6c] sm:$0xf]
    %v87 = vld [vmem:[#allocation5 + $0x70] sm:$0xf]
    %v88 = vld [vmem:[#allocation5 + $0x74] sm:$0xf]
    %v89 = vld [vmem:[#allocation5 + $0x78] sm:$0xf]
    %v90 = vld [vmem:[#allocation5 + $0x7c] sm:$0xf]
    %v91 = vld [vmem:[#allocation5 + $0x80] sm:$0xf]
    %v92 = vld [vmem:[#allocation5 + $0x84] sm:$0xf]
    %v93 = vld [vmem:[#allocation5 + $0x88] sm:$0xf]
    %v94 = vld [vmem:[#allocation5 + $0x8c] sm:$0xf]
    %v95 = vld [vmem:[#allocation5 + $0x90] sm:$0xf]
    %v96 = vld [vmem:[#allocation5 + $0x94] sm:$0xf]
    %v97 = vld [vmem:[#allocation5 + $0x98] sm:$0xf]
    %v98 = vld [vmem:[#allocation5 + $0x9c] sm:$0xf]
    %v99 = vld [vmem:[#allocation5 + $0xa0] sm:$0xf]
    %v100 = vld [vmem:[#allocation5 + $0xa4] sm:$0xf]
    %v101 = vld [vmem:[#allocation5 + $0xa8] sm:$0xf]
    %v102 = vld [vmem:[#allocation5 + $0xac] sm:$0xf]
    %v103 = vld [vmem:[#allocation5 + $0xb0] sm:$0xf]
    %v104 = vld [vmem:[#allocation5 + $0xb4] sm:$0xf]
    %v105 = vld [vmem:[#allocation5 + $0xb8] sm:$0xf]
    %v106 = vld [vmem:[#allocation5 + $0xbc] sm:$0xf]
    %v107 = vld [vmem:[#allocation5 + $0xc0] sm:$0xf]
    %v108 = vld [vmem:[#allocation5 + $0xc4] sm:$0xf]
    %v109 = vld [vmem:[#allocation5 + $0xc8] sm:$0xf]
    %v110 = vld [vmem:[#allocation5 + $0xcc] sm:$0xf]
    %v111 = vld [vmem:[#allocation5 + $0xd0] sm:$0xf]
    %v112 = vld [vmem:[#allocation5 + $0xd4] sm:$0xf]
    %v113 = vld [vmem:[#allocation5 + $0xd8] sm:$0xf]
    %v114 = vld [vmem:[#allocation5 + $0xdc] sm:$0xf]
    %v115 = vld [vmem:[#allocation5 + $0xe0] sm:$0xf]
    %v116 = vld [vmem:[#allocation5 + $0xe4] sm:$0xf]
    %v117 = vld [vmem:[#allocation5 + $0xe8] sm:$0xf]
    %v118 = vld [vmem:[#allocation5 + $0xec] sm:$0xf]
    %v119 = vld [vmem:[#allocation5 + $0xf0] sm:$0xf]
    %v120 = vld [vmem:[#allocation5 + $0xf4] sm:$0xf]
    %v121 = vld [vmem:[#allocation5 + $0xf8] sm:$0xf]
    %v122 = vld [vmem:[#allocation5 + $0xfc] sm:$0xf]
    %v123 = vld [vmem:[#allocation5 + $0x100] sm:$0xf]
    %v124 = vld [vmem:[#allocation5 + $0x104] sm:$0xf]
    %v125 = vld [vmem:[#allocation5 + $0x108] sm:$0xf]
    %v126 = vld [vmem:[#allocation5 + $0x10c] sm:$0xf]
    %v127 = vld [vmem:[#allocation5 + $0x110] sm:$0xf]
    %v128 = vld [vmem:[#allocation5 + $0x114] sm:$0xf]
    %v129 = vld [vmem:[#allocation5 + $0x118] sm:$0xf]
    %v130 = vld [vmem:[#allocation5 + $0x11c] sm:$0xf]
    %v131 = vld [vmem:[#allocation5 + $0x120] sm:$0xf]
    %v132 = vld [vmem:[#allocation5 + $0x124] sm:$0xf]
    %v133 = vld [vmem:[#allocation5 + $0x128] sm:$0xf]
    %v134 = vld [vmem:[#allocation5 + $0x12c] sm:$0xf]
    %v135 = vld [vmem:[#allocation5 + $0x130] sm:$0xf]
    %v136 = vld [vmem:[#allocation5 + $0x134] sm:$0xf]
    %v137 = vld [vmem:[#allocation5 + $0x138] sm:$0xf]
    %v138 = vld [vmem:[#allocation5 + $0x13c] sm:$0xf]
    %v139 = vld [vmem:[#allocation5 + $0x140] sm:$0xf]
    %v140 = vld [vmem:[#allocation5 + $0x144] sm:$0xf]
    %v141 = vld [vmem:[#allocation5 + $0x148] sm:$0xf]
    %v142 = vld [vmem:[#allocation5 + $0x14c] sm:$0xf]
    %v143 = vld [vmem:[#allocation5 + $0x150] sm:$0xf]
    %v144 = vld [vmem:[#allocation5 + $0x154] sm:$0xf]
    %v145 = vld [vmem:[#allocation5 + $0x158] sm:$0xf]
    %v146 = vld [vmem:[#allocation5 + $0x15c] sm:$0xf]
    %v147 = vld [vmem:[#allocation5 + $0x160] sm:$0xf]
    %v148 = vld [vmem:[#allocation5 + $0x164] sm:$0xf]
    %v149 = vld [vmem:[#allocation5 + $0x168] sm:$0xf]
    %v150 = vld [vmem:[#allocation5 + $0x16c] sm:$0xf]
    %v151 = vld [vmem:[#allocation5 + $0x170] sm:$0xf]
    %v152 = vld [vmem:[#allocation5 + $0x174] sm:$0xf]
    %v153 = vld [vmem:[#allocation5 + $0x178] sm:$0xf]
    %v154 = vld [vmem:[#allocation5 + $0x17c] sm:$0xf]
    %v155 = vlaneseq
    %v156 = vand.u32 %v155, 127
    %v157 = vadd.s32 %v156, 128
    %v158 = vld [vmem:[%s0] sm:$0x3]
    %159 = vset.pattern.permute.xlu0 0
    %160 = vperm.xlu0 %159, %v158
    %v161 = vpop.permute.xlu0 %160
    %vm162 = vcmp.eq.s32.totalorder %v156, %v161
    %vm163 = vcmp.eq.s32.totalorder %v157, %v161
    %v164 = vsel %vm162, 1, 0
    %v165 = vsel %vm163, 1, 0
    %v166 = vcvt.s32.f32 %v164
    %v167 = vcvt.s32.f32 %v165
    %v168 = vpack.c.bf16 %v166, %v166
    %v169 = vpack.c.bf16 %v167, %v167
    %v170 = vld [vmem:[#allocation7] sm:$0xf]
    %v171 = vld [vmem:[#allocation7 + $0x4] sm:$0xf]
    %v172 = vld [vmem:[#allocation7 + $0x8] sm:$0xf]
    %v173 = vld [vmem:[#allocation7 + $0xc] sm:$0xf]
    %v174 = vld [vmem:[#allocation7 + $0x10] sm:$0xf]
    %v175 = vld [vmem:[#allocation7 + $0x14] sm:$0xf]
    %v176 = vld [vmem:[#allocation7 + $0x18] sm:$0xf]
    %v177 = vld [vmem:[#allocation7 + $0x1c] sm:$0xf]
    %v178 = vld [vmem:[#allocation7 + $0x20] sm:$0xf]
    %v179 = vld [vmem:[#allocation7 + $0x24] sm:$0xf]
    %v180 = vld [vmem:[#allocation7 + $0x28] sm:$0xf]
    %v181 = vld [vmem:[#allocation7 + $0x2c] sm:$0xf]
    %v182 = vld [vmem:[#allocation7 + $0x30] sm:$0xf]
    %v183 = vld [vmem:[#allocation7 + $0x34] sm:$0xf]
    %v184 = vld [vmem:[#allocation7 + $0x38] sm:$0xf]
    %v185 = vld [vmem:[#allocation7 + $0x3c] sm:$0xf]
    %v186 = vld [vmem:[#allocation7 + $0x40] sm:$0xf]
    %v187 = vld [vmem:[#allocation7 + $0x44] sm:$0xf]
    %v188 = vld [vmem:[#allocation7 + $0x48] sm:$0xf]
    %v189 = vld [vmem:[#allocation7 + $0x4c] sm:$0xf]
    %v190 = vld [vmem:[#allocation7 + $0x50] sm:$0xf]
    %v191 = vld [vmem:[#allocation7 + $0x54] sm:$0xf]
    %v192 = vld [vmem:[#allocation7 + $0x58] sm:$0xf]
    %v193 = vld [vmem:[#allocation7 + $0x5c] sm:$0xf]
    %v194 = vld [vmem:[#allocation7 + $0x60] sm:$0xf]
    %v195 = vld [vmem:[#allocation7 + $0x64] sm:$0xf]
    %v196 = vld [vmem:[#allocation7 + $0x68] sm:$0xf]
    %v197 = vld [vmem:[#allocation7 + $0x6c] sm:$0xf]
    %v198 = vld [vmem:[#allocation7 + $0x70] sm:$0xf]
    %v199 = vld [vmem:[#allocation7 + $0x74] sm:$0xf]
    %v200 = vld [vmem:[#allocation7 + $0x78] sm:$0xf]
    %v201 = vld [vmem:[#allocation7 + $0x7c] sm:$0xf]
    %v234 = vunpack.c.l.b16 %v170
    %v235 = vunpack.c.l.b16 %v171
    %v236 = vunpack.c.l.b16 %v172
    %v237 = vunpack.c.l.b16 %v173
    %v238 = vunpack.c.l.b16 %v174
    %v239 = vunpack.c.l.b16 %v175
    %v240 = vunpack.c.l.b16 %v176
    %v241 = vunpack.c.l.b16 %v177
    %v242 = vunpack.c.l.b16 %v178
    %v243 = vunpack.c.l.b16 %v179
    %v244 = vunpack.c.l.b16 %v180
    %v245 = vunpack.c.l.b16 %v181
    %v246 = vunpack.c.l.b16 %v182
    %v247 = vunpack.c.l.b16 %v183
    %v248 = vunpack.c.l.b16 %v184
    %v249 = vunpack.c.l.b16 %v185
    %v250 = vunpack.c.l.b16 %v186
    %v251 = vunpack.c.l.b16 %v187
    %v252 = vunpack.c.l.b16 %v188
    %v253 = vunpack.c.l.b16 %v189
    %v254 = vunpack.c.l.b16 %v190
    %v255 = vunpack.c.l.b16 %v191
    %v256 = vunpack.c.l.b16 %v192
    %v257 = vunpack.c.l.b16 %v193
    %v258 = vunpack.c.l.b16 %v194
    %v259 = vunpack.c.l.b16 %v195
    %v260 = vunpack.c.l.b16 %v196
    %v261 = vunpack.c.l.b16 %v197
    %v262 = vunpack.c.l.b16 %v198
    %v263 = vunpack.c.l.b16 %v199
    %v264 = vunpack.c.l.b16 %v200
    %v265 = vunpack.c.l.b16 %v201
    %v266 = vpack.c.b16 %v235, %v234
    %v267 = vpack.c.b16 %v237, %v236
    %v268 = vpack.c.b16 %v239, %v238
    %v269 = vpack.c.b16 %v241, %v240
    %v270 = vpack.c.b16 %v243, %v242
    %v271 = vpack.c.b16 %v245, %v244
    %v272 = vpack.c.b16 %v247, %v246
    %v273 = vpack.c.b16 %v249, %v248
    %v274 = vpack.c.b16 %v251, %v250
    %v275 = vpack.c.b16 %v253, %v252
    %v276 = vpack.c.b16 %v255, %v254
    %v277 = vpack.c.b16 %v257, %v256
    %v278 = vpack.c.b16 %v259, %v258
    %v279 = vpack.c.b16 %v261, %v260
    %v280 = vpack.c.b16 %v263, %v262
    %v281 = vpack.c.b16 %v265, %v264
    %298 = vmatprep.subr.bf16.mxu0 0
    %299 = vmatpush1.bf16.msra.mxu0 %v266
    %300 = vmatprep.subr.bf16.mxu0 0
    %301 = vmatpush1.bf16.msra.mxu0 %v267
    %302 = vmatprep.subr.bf16.mxu0 0
    %303 = vmatpush1.bf16.msra.mxu0 %v268
    %304 = vmatprep.subr.bf16.mxu0 0
    %305 = vmatpush1.bf16.msra.mxu0 %v269
    %306 = vmatprep.subr.bf16.mxu0 0
    %307 = vmatpush1.bf16.msra.mxu0 %v270
    %308 = vmatprep.subr.bf16.mxu0 0
    %309 = vmatpush1.bf16.msra.mxu0 %v271
    %310 = vmatprep.subr.bf16.mxu0 0
    %311 = vmatpush1.bf16.msra.mxu0 %v272
    %312 = vmatprep.subr.bf16.mxu0 0
    %313 = vmatpush1.bf16.msra.mxu0 %v273
    %314 = vmatprep.subr.bf16.mxu0 0
    %315 = vmatpush1.bf16.msra.mxu0 %v274
    %316 = vmatprep.subr.bf16.mxu0 0
    %317 = vmatpush1.bf16.msra.mxu0 %v275
    %318 = vmatprep.subr.bf16.mxu0 0
    %319 = vmatpush1.bf16.msra.mxu0 %v276
    %320 = vmatprep.subr.bf16.mxu0 0
    %321 = vmatpush1.bf16.msra.mxu0 %v277
    %322 = vmatprep.subr.bf16.mxu0 0
    %323 = vmatpush1.bf16.msra.mxu0 %v278
    %324 = vmatprep.subr.bf16.mxu0 0
    %325 = vmatpush1.bf16.msra.mxu0 %v279
    %326 = vmatprep.subr.bf16.mxu0 0
    %327 = vmatpush1.bf16.msra.mxu0 %v280
    %328 = vmatprep.subr.bf16.mxu0 0
    %329 = vmatpush1.bf16.msra.mxu0 %v281
    %330 = vmatprep.mubr.bf16.mxu0 %v169
    %331 = vmatmul.mubr.bf16.gmra.mrb[0].mxu0 %v168
    %v332 = vpop.f32.mrb[0].mxu0
    %v333 = vadd.f32 0.0, %v332
    %v334 = vpop.f32.mrb[0].mxu0
    %v335 = vpop.f32.mrb[0].mxu0
    %v336 = vpop.f32.mrb[0].mxu0
    %337 = vdwg.mxu0
    %v339 = vcombine.high %v58, %v58
    %v341 = vunpack.c.l.s4 1966171168
    %v342 = vunpack.c.0.s8 %v341
    %v343 = vlaneseq
    %v344 = vshrl.u32 %v343, 7
    %v345 = vsub.s32 %v342, %v344
    %v346 = vrot.slane %v58, %v345
    %v348 = vunpack.c.l.s4 1966171168
    %v349 = vunpack.c.0.s8 %v348
    %v350 = vlaneseq
    %v351 = vshrl.u32 %v350, 7
    %v352 = vsub.s32 %v349, %v351
    %v353 = vrot.slane %v339, %v352
    %v354 = vcombine.high %v346, %v346
    %v355 = vcombine.high %v353, %v353
    %v357 = vunpack.c.l.s4 1966171168
    %v358 = vunpack.c.0.s8 %v357
    %v359 = vlaneseq
    %v360 = vshrl.u32 %v359, 7
    %v361 = vsub.s32 %v358, %v360
    %v362 = vrot.slane %v346, %v361
    %v364 = vunpack.c.l.s4 1966171168
    %v365 = vunpack.c.0.s8 %v364
    %v366 = vlaneseq
    %v367 = vshrl.u32 %v366, 7
    %v368 = vsub.s32 %v365, %v367
    %v369 = vrot.slane %v353, %v368
    %v371 = vunpack.c.l.s4 1966171168
    %v372 = vunpack.c.0.s8 %v371
    %v373 = vlaneseq
    %v374 = vshrl.u32 %v373, 7
    %v375 = vsub.s32 %v372, %v374
    %v376 = vrot.slane %v354, %v375
    %v378 = vunpack.c.l.s4 1966171168
    %v379 = vunpack.c.0.s8 %v378
    %v380 = vlaneseq
    %v381 = vshrl.u32 %v380, 7
    %v382 = vsub.s32 %v379, %v381
    %v383 = vrot.slane %v355, %v382
    %v384 = vcombine.high %v362, %v362
    %v385 = vcombine.high %v376, %v376
    %v488 = vunpack.c.l.b16 %v59
    %v489 = vunpack.c.l.b16 %v60
    %v490 = vunpack.c.l.b16 %v61
    %v491 = vunpack.c.l.b16 %v62
    %v492 = vunpack.c.l.b16 %v63
    %v493 = vunpack.c.l.b16 %v64
    %v494 = vunpack.c.l.b16 %v65
    %v495 = vunpack.c.l.b16 %v66
    %v496 = vunpack.c.l.b16 %v67
    %v497 = vunpack.c.l.b16 %v68
    %v498 = vunpack.c.l.b16 %v69
    %v499 = vunpack.c.l.b16 %v70
    %v500 = vunpack.c.l.b16 %v71
    %v501 = vunpack.c.l.b16 %v72
    %v502 = vunpack.c.l.b16 %v73
    %v503 = vunpack.c.l.b16 %v74
    %v504 = vunpack.c.l.b16 %v75
    %v505 = vunpack.c.l.b16 %v76
    %v506 = vunpack.c.l.b16 %v77
    %v507 = vunpack.c.l.b16 %v78
    %v508 = vunpack.c.l.b16 %v79
    %v509 = vunpack.c.l.b16 %v80
    %v510 = vunpack.c.l.b16 %v81
    %v511 = vunpack.c.l.b16 %v82
    %v512 = vunpack.c.l.b16 %v83
    %v513 = vunpack.c.l.b16 %v84
    %v514 = vunpack.c.l.b16 %v85
    %v515 = vunpack.c.l.b16 %v86
    %v516 = vunpack.c.l.b16 %v87
    %v517 = vunpack.c.l.b16 %v88
    %v518 = vunpack.c.l.b16 %v89
    %v519 = vunpack.c.l.b16 %v90
    %v520 = vunpack.c.l.b16 %v91
    %v521 = vunpack.c.l.b16 %v92
    %v522 = vunpack.c.l.b16 %v93
    %v523 = vunpack.c.l.b16 %v94
    %v524 = vunpack.c.l.b16 %v95
    %v525 = vunpack.c.l.b16 %v96
    %v526 = vunpack.c.l.b16 %v97
    %v527 = vunpack.c.l.b16 %v98
    %v528 = vunpack.c.l.b16 %v99
    %v529 = vunpack.c.l.b16 %v100
    %v530 = vunpack.c.l.b16 %v101
    %v531 = vunpack.c.l.b16 %v102
    %v532 = vunpack.c.l.b16 %v103
    %v533 = vunpack.c.l.b16 %v104
    %v534 = vunpack.c.l.b16 %v105
    %v535 = vunpack.c.l.b16 %v106
    %v536 = vunpack.c.l.b16 %v107
    %v537 = vunpack.c.l.b16 %v108
    %v538 = vunpack.c.l.b16 %v109
    %v539 = vunpack.c.l.b16 %v110
    %v540 = vunpack.c.l.b16 %v111
    %v541 = vunpack.c.l.b16 %v112
    %v542 = vunpack.c.l.b16 %v113
    %v543 = vunpack.c.l.b16 %v114
    %v544 = vunpack.c.l.b16 %v115
    %v545 = vunpack.c.l.b16 %v116
    %v546 = vunpack.c.l.b16 %v117
    %v547 = vunpack.c.l.b16 %v118
    %v548 = vunpack.c.l.b16 %v119
    %v549 = vunpack.c.l.b16 %v120
    %v550 = vunpack.c.l.b16 %v121
    %v551 = vunpack.c.l.b16 %v122
    %v552 = vunpack.c.l.b16 %v123
    %v553 = vunpack.c.l.b16 %v124
    %v554 = vunpack.c.l.b16 %v125
    %v555 = vunpack.c.l.b16 %v126
    %v556 = vunpack.c.l.b16 %v127
    %v557 = vunpack.c.l.b16 %v128
    %v558 = vunpack.c.l.b16 %v129
    %v559 = vunpack.c.l.b16 %v130
    %v560 = vunpack.c.l.b16 %v131
    %v561 = vunpack.c.l.b16 %v132
    %v562 = vunpack.c.l.b16 %v133
    %v563 = vunpack.c.l.b16 %v134
    %v564 = vunpack.c.l.b16 %v135
    %v565 = vunpack.c.l.b16 %v136
    %v566 = vunpack.c.l.b16 %v137
    %v567 = vunpack.c.l.b16 %v138
    %v568 = vunpack.c.l.b16 %v139
    %v569 = vunpack.c.l.b16 %v140
    %v570 = vunpack.c.l.b16 %v141
    %v571 = vunpack.c.l.b16 %v142
    %v572 = vunpack.c.l.b16 %v143
    %v573 = vunpack.c.l.b16 %v144
    %v574 = vunpack.c.l.b16 %v145
    %v575 = vunpack.c.l.b16 %v146
    %v576 = vunpack.c.l.b16 %v147
    %v577 = vunpack.c.l.b16 %v148
    %v578 = vunpack.c.l.b16 %v149
    %v579 = vunpack.c.l.b16 %v150
    %v580 = vunpack.c.l.b16 %v151
    %v581 = vunpack.c.l.b16 %v152
    %v582 = vunpack.c.l.b16 %v153
    %v583 = vunpack.c.l.b16 %v154
    %v584 = vpack.c.b16 %v489, %v488
    %v585 = vpack.c.b16 %v491, %v490
    %v586 = vpack.c.b16 %v493, %v492
    %v587 = vpack.c.b16 %v495, %v494
    %v588 = vpack.c.b16 %v497, %v496
    %v589 = vpack.c.b16 %v499, %v498
    %v590 = vpack.c.b16 %v501, %v500
    %v591 = vpack.c.b16 %v503, %v502
    %v592 = vpack.c.b16 %v505, %v504
    %v593 = vpack.c.b16 %v507, %v506
    %v594 = vpack.c.b16 %v509, %v508
    %v595 = vpack.c.b16 %v511, %v510
    %v596 = vpack.c.b16 %v513, %v512
    %v597 = vpack.c.b16 %v515, %v514
    %v598 = vpack.c.b16 %v517, %v516
    %v599 = vpack.c.b16 %v519, %v518
    %v600 = vpack.c.b16 %v521, %v520
    %v601 = vpack.c.b16 %v523, %v522
    %v602 = vpack.c.b16 %v525, %v524
    %v603 = vpack.c.b16 %v527, %v526
    %v604 = vpack.c.b16 %v529, %v528
    %v605 = vpack.c.b16 %v531, %v530
    %v606 = vpack.c.b16 %v533, %v532
    %v607 = vpack.c.b16 %v535, %v534
    %v608 = vpack.c.b16 %v537, %v536
    %v609 = vpack.c.b16 %v539, %v538
    %v610 = vpack.c.b16 %v541, %v540
    %v611 = vpack.c.b16 %v543, %v542
    %v612 = vpack.c.b16 %v545, %v544
    %v613 = vpack.c.b16 %v547, %v546
    %v614 = vpack.c.b16 %v549, %v548
    %v615 = vpack.c.b16 %v551, %v550
    %v616 = vpack.c.b16 %v553, %v552
    %v617 = vpack.c.b16 %v555, %v554
    %v618 = vpack.c.b16 %v557, %v556
    %v619 = vpack.c.b16 %v559, %v558
    %v620 = vpack.c.b16 %v561, %v560
    %v621 = vpack.c.b16 %v563, %v562
    %v622 = vpack.c.b16 %v565, %v564
    %v623 = vpack.c.b16 %v567, %v566
    %v624 = vpack.c.b16 %v569, %v568
    %v625 = vpack.c.b16 %v571, %v570
    %v626 = vpack.c.b16 %v573, %v572
    %v627 = vpack.c.b16 %v575, %v574
    %v628 = vpack.c.b16 %v577, %v576
    %v629 = vpack.c.b16 %v579, %v578
    %v630 = vpack.c.b16 %v581, %v580
    %v631 = vpack.c.b16 %v583, %v582
    %680 = vmatprep.subr.bf16.mxu0 0
    %681 = vmatpush1.bf16.msra.mxu0 %v584
    %682 = vmatprep.subr.bf16.mxu0 0
    %683 = vmatpush1.bf16.msra.mxu0 %v585
    %684 = vmatprep.subr.bf16.mxu0 0
    %685 = vmatpush1.bf16.msra.mxu0 %v586
    %686 = vmatprep.subr.bf16.mxu0 0
    %687 = vmatpush1.bf16.msra.mxu0 %v587
    %688 = vmatprep.subr.bf16.mxu0 0
    %689 = vmatpush1.bf16.msra.mxu0 %v588
    %690 = vmatprep.subr.bf16.mxu0 0
    %691 = vmatpush1.bf16.msra.mxu0 %v589
    %692 = vmatprep.subr.bf16.mxu0 0
    %693 = vmatpush1.bf16.msra.mxu0 %v590
    %694 = vmatprep.subr.bf16.mxu0 0
    %695 = vmatpush1.bf16.msra.mxu0 %v591
    %696 = vmatprep.subr.bf16.mxu0 0
    %697 = vmatpush1.bf16.msra.mxu0 %v592
    %698 = vmatprep.subr.bf16.mxu0 0
    %699 = vmatpush1.bf16.msra.mxu0 %v593
    %700 = vmatprep.subr.bf16.mxu0 0
    %701 = vmatpush1.bf16.msra.mxu0 %v594
    %702 = vmatprep.subr.bf16.mxu0 0
    %703 = vmatpush1.bf16.msra.mxu0 %v595
    %704 = vmatprep.subr.bf16.mxu0 0
    %705 = vmatpush1.bf16.msra.mxu0 %v596
    %706 = vmatprep.subr.bf16.mxu0 0
    %707 = vmatpush1.bf16.msra.mxu0 %v597
    %708 = vmatprep.subr.bf16.mxu0 0
    %709 = vmatpush1.bf16.msra.mxu0 %v598
    %710 = vmatprep.subr.bf16.mxu0 0
    %711 = vmatpush1.bf16.msra.mxu0 %v599
    %712 = vmatprep.mubr.bf16.mxu0 %v376
    %713 = vmatmul.mubr.bf16.gmra.mrb[0].mxu0 %v362
    %v714 = vpop.f32.mrb[0].mxu0
    %v715 = vadd.f32 %v333, %v714
    %v716 = vpop.f32.mrb[0].mxu0
    %v717 = vpop.f32.mrb[0].mxu0
    %v718 = vpop.f32.mrb[0].mxu0
    %719 = vdwg.mxu0
    %720 = vmatprep.subr.bf16.mxu0 0
    %721 = vmatpush1.bf16.msra.mxu0 %v600
    %722 = vmatprep.subr.bf16.mxu0 0
    %723 = vmatpush1.bf16.msra.mxu0 %v601
    %724 = vmatprep.subr.bf16.mxu0 0
    %725 = vmatpush1.bf16.msra.mxu0 %v602
    %726 = vmatprep.subr.bf16.mxu0 0
    %727 = vmatpush1.bf16.msra.mxu0 %v603
    %728 = vmatprep.subr.bf16.mxu0 0
    %729 = vmatpush1.bf16.msra.mxu0 %v604
    %730 = vmatprep.subr.bf16.mxu0 0
    %731 = vmatpush1.bf16.msra.mxu0 %v605
    %732 = vmatprep.subr.bf16.mxu0 0
    %733 = vmatpush1.bf16.msra.mxu0 %v606
    %734 = vmatprep.subr.bf16.mxu0 0
    %735 = vmatpush1.bf16.msra.mxu0 %v607
    %736 = vmatprep.subr.bf16.mxu0 0
    %737 = vmatpush1.bf16.msra.mxu0 %v608
    %738 = vmatprep.subr.bf16.mxu0 0
    %739 = vmatpush1.bf16.msra.mxu0 %v609
    %740 = vmatprep.subr.bf16.mxu0 0
    %741 = vmatpush1.bf16.msra.mxu0 %v610
    %742 = vmatprep.subr.bf16.mxu0 0
    %743 = vmatpush1.bf16.msra.mxu0 %v611
    %744 = vmatprep.subr.bf16.mxu0 0
    %745 = vmatpush1.bf16.msra.mxu0 %v612
    %746 = vmatprep.subr.bf16.mxu0 0
    %747 = vmatpush1.bf16.msra.mxu0 %v613
    %748 = vmatprep.subr.bf16.mxu0 0
    %749 = vmatpush1.bf16.msra.mxu0 %v614
    %750 = vmatprep.subr.bf16.mxu0 0
    %751 = vmatpush1.bf16.msra.mxu0 %v615
    %752 = vmatprep.mubr.bf16.mxu0 %v385
    %753 = vmatmul.mubr.bf16.gmra.mrb[0].mxu0 %v384
    %v754 = vpop.f32.mrb[0].mxu0
    %v755 = vadd.f32 %v715, %v754
    %v756 = vpop.f32.mrb[0].mxu0
    %v757 = vpop.f32.mrb[0].mxu0
    %v758 = vpop.f32.mrb[0].mxu0
    %759 = vdwg.mxu0
    %760 = vmatprep.subr.bf16.mxu0 0
    %761 = vmatpush1.bf16.msra.mxu0 %v616
    %762 = vmatprep.subr.bf16.mxu0 0
    %763 = vmatpush1.bf16.msra.mxu0 %v617
    %764 = vmatprep.subr.bf16.mxu0 0
    %765 = vmatpush1.bf16.msra.mxu0 %v618
    %766 = vmatprep.subr.bf16.mxu0 0
    %767 = vmatpush1.bf16.msra.mxu0 %v619
    %768 = vmatprep.subr.bf16.mxu0 0
    %769 = vmatpush1.bf16.msra.mxu0 %v620
    %770 = vmatprep.subr.bf16.mxu0 0
    %771 = vmatpush1.bf16.msra.mxu0 %v621
    %772 = vmatprep.subr.bf16.mxu0 0
    %773 = vmatpush1.bf16.msra.mxu0 %v622
    %774 = vmatprep.subr.bf16.mxu0 0
    %775 = vmatpush1.bf16.msra.mxu0 %v623
    %776 = vmatprep.subr.bf16.mxu0 0
    %777 = vmatpush1.bf16.msra.mxu0 %v624
    %778 = vmatprep.subr.bf16.mxu0 0
    %779 = vmatpush1.bf16.msra.mxu0 %v625
    %780 = vmatprep.subr.bf16.mxu0 0
    %781 = vmatpush1.bf16.msra.mxu0 %v626
    %782 = vmatprep.subr.bf16.mxu0 0
    %783 = vmatpush1.bf16.msra.mxu0 %v627
    %784 = vmatprep.subr.bf16.mxu0 0
    %785 = vmatpush1.bf16.msra.mxu0 %v628
    %786 = vmatprep.subr.bf16.mxu0 0
    %787 = vmatpush1.bf16.msra.mxu0 %v629
    %788 = vmatprep.subr.bf16.mxu0 0
    %789 = vmatpush1.bf16.msra.mxu0 %v630
    %790 = vmatprep.subr.bf16.mxu0 0
    %791 = vmatpush1.bf16.msra.mxu0 %v631
    %792 = vmatprep.mubr.bf16.mxu0 %v383
    %793 = vmatmul.mubr.bf16.gmra.mrb[0].mxu0 %v369
    %v794 = vpop.f32.mrb[0].mxu0
    %v795 = vadd.f32 %v755, %v794
    %v796 = vpop.f32.mrb[0].mxu0
    %v797 = vpop.f32.mrb[0].mxu0
    %v798 = vpop.f32.mrb[0].mxu0
    %799 = vdwg.mxu0
    %800 = vst [vmem:[#allocation8] sm:$0x3] %v795
    // Predicated region
    $region30: #{tpu_custom_call.1} parent=1 // pred_check
      _
    $region31: #{tpu_custom_call.1} parent=1 // pred_check_branch
      %802 = sbr.rel (0) target = $region33
    $region32: #{tpu_custom_call.1} parent=1 // pred_region
      %s804 = ssub.s32 32, 32
      %805 = vsyncadd [#allocation4], %s804
      %s807 = sshll.u32 [#allocation8], 4
      %s808 = int_to_ptr.vmem [resolvable:$true] %s807
      %810 = dma.vmem_to_hbm [thread:$0]  %s808, 32, %s4, [#allocation4]
    $region33: #{tpu_custom_call.1} parent=1 // pred_fallthru
      _
    // Predicated region
    $region34: #{tpu_custom_call.1} parent=1 // pred_check
      _
    $region35: #{tpu_custom_call.1} parent=1 // pred_check_branch
      %812 = sbr.rel (0) target = $region37
    $region36: #{tpu_custom_call.1} parent=1 // pred_region
      %813 = dma.done [#allocation4], 32
    $region37: #{tpu_custom_call.1} parent=1 // pred_fallthru
      _
    %814 = vsyncpa [#allocation3], 1
    %815 = vsyncpa [#allocation6], 1
    %816 = vsyncpa [#allocation4], 1

</llo_original>
